<compile_context>
chip_gen: v6e
topology: v6e:2x2x1
jax: 0.10.0
libtpu: 0.0.40
codegen_flags: <defaults>
</compile_context>

<pallas_src>
import math
import functools

import jax
import jax.numpy as jnp
from jax.experimental import pallas as pl
from jax.experimental.pallas import tpu as pltpu


def _round_up(x, m):
    return ((x + m - 1) // m) * m


def _vmem_capacity_bytes():
    """Physical VMEM per TensorCore (128 MiB v5e/v6e, 64 MiB v7x)."""
    try:
        return int(pltpu.get_tpu_info().vmem_capacity_bytes)
    except Exception:
        return 64 << 20  # conservative default (v7x per-TC)


# ---------------------------------------------------------------------------
# Kernels
# ---------------------------------------------------------------------------

def _ffn_resident_kernel(x_ref, w_ref, o_ref):
    # Whole (Kp, Np) weight resident in VMEM (constant block index); one dot per
    # M-tile, no reduction loop needed.
    o_ref[...] = jnp.dot(
        x_ref[...], w_ref[...], preferred_element_type=jnp.float32
    ).astype(o_ref.dtype)


def _ffn_stream_kernel_f32(x_ref, w_ref, o_ref):
    # f32 output: accumulate directly into the (K-resident) output block.
    @pl.when(pl.program_id(2) == 0)
    def _():
        o_ref[...] = jnp.zeros_like(o_ref)

    o_ref[...] += jnp.dot(x_ref[...], w_ref[...], preferred_element_type=jnp.float32)


def _ffn_stream_kernel_acc(x_ref, w_ref, o_ref, acc_ref):
    # Narrow output dtype: keep a separate f32 accumulator, cast on writeback.
    @pl.when(pl.program_id(2) == 0)
    def _():
        acc_ref[...] = jnp.zeros_like(acc_ref)

    acc_ref[...] += jnp.dot(x_ref[...], w_ref[...], preferred_element_type=jnp.float32)

    @pl.when(pl.program_id(2) == pl.num_programs(2) - 1)
    def _():
        o_ref[...] = acc_ref[...].astype(o_ref.dtype)


# ---------------------------------------------------------------------------
# Wrapper
# ---------------------------------------------------------------------------

def prepare_ffn_weight(weight, mxu_dtype=jnp.bfloat16):
    """One-time weight prep: torch-layout (N, K) -> MXU-natural (K, N) in mxu_dtype.

    Do this once at parameter init / load time and reuse across calls.
    """
    return jnp.asarray(weight).T.astype(mxu_dtype)


def ffn_forward(x, w_kn, bias=None, *, out_dtype=None, tiles=None,
                weight_resident=None):
    """out = x @ w_kn (+ bias).  w_kn is a prepared (K, N) weight (see above).

    x may have arbitrary leading dims; the last dim is the contraction (K).
    """
    orig_shape = x.shape
    K = orig_shape[-1]
    Kw, N = w_kn.shape
    assert K == Kw, "input_size mismatch"

    x2 = x.reshape(-1, K)
    M = x2.shape[0]

    out_dtype = jnp.dtype(out_dtype if out_dtype is not None else x.dtype)
    mxu_dtype = w_kn.dtype
    in_bytes = jnp.dtype(mxu_dtype).itemsize
    out_bytes = out_dtype.itemsize

    # --- chip-aware tile / VMEM-budget selection -----------------------------
    vmem_cap = _vmem_capacity_bytes()
    if vmem_cap >= (100 << 20):          # v5e / v6e: 128 MiB VMEM per core
        vmem_limit = 96 << 20
        tm0, tn0, tk0 = 1024, 2048, 512  # ~680 flops/byte (>= v6e roofline)
    else:                                # v7x: 64 MiB VMEM per TensorCore
        vmem_limit = 48 << 20
        tm0, tn0, tk0 = 512, 1024, 512   # ~341 flops/byte (>= v7x roofline)
    if tiles is not None:
        tm0, tn0, tk0 = tiles

    # Cast BEFORE padding so the pad copy moves half the bytes.
    x_c = x2.astype(mxu_dtype)

    Kp_full = _round_up(K, 128)
    Np_full = _round_up(N, 128)
    w_bytes_resident = Kp_full * Np_full * in_bytes
    if weight_resident is None:
        weight_resident = w_bytes_resident <= (vmem_limit // 4)

    if weight_resident:
        # ------------------- weight-resident fast path -----------------------
        # Weight is DMA'd exactly once (constant block index); only x / out stream.
        Kp, Np = Kp_full, Np_full
        tm = min(tm0, _round_up(M, 8))

        def _fits(tm_):
            fp = (2 * (tm_ * Kp * in_bytes + tm_ * Np * out_bytes)
                  + 2 * w_bytes_resident)
            return fp <= int(vmem_limit * 0.8)

        while tm > 8 and not _fits(tm):
            tm = max(8, tm // 2)

        Mp = _round_up(M, tm)
        x_p = x_c if (Mp == M and Kp == K) else jnp.pad(
            x_c, ((0, Mp - M), (0, Kp - K)))
        w_p = w_kn if (Kp == K and Np == N) else jnp.pad(
            w_kn, ((0, Kp - K), (0, Np - N)))

        cost = pl.CostEstimate(
            flops=2 * Mp * Np * Kp,
            transcendentals=0,
            bytes_accessed=Mp * Kp * in_bytes + Kp * Np * in_bytes
                           + Mp * Np * out_bytes,
        )

        out_p = pl.pallas_call(
            _ffn_resident_kernel,
            out_shape=jax.ShapeDtypeStruct((Mp, Np), out_dtype),
            grid_spec=pltpu.PrefetchScalarGridSpec(
                num_scalar_prefetch=0,
                grid=(Mp // tm,),
                in_specs=[
                    pl.BlockSpec((tm, Kp), lambda i: (i, 0)),
                    pl.BlockSpec((Kp, Np), lambda i: (0, 0)),  # resident weight
                ],
                out_specs=pl.BlockSpec((tm, Np), lambda i: (i, 0)),
            ),
            compiler_params=pltpu.CompilerParams(
                dimension_semantics=("parallel",),
                vmem_limit_bytes=vmem_limit,
            ),
            cost_estimate=cost,
        )(x_p, w_p)

    else:
        # ------------------- streaming M/N/K-tiled path -----------------------
        tm = min(tm0, _round_up(M, 8))
        tn = min(tn0, _round_up(N, 128))
        tk = min(tk0, _round_up(K, 128))
        Mp, Np, Kp = _round_up(M, tm), _round_up(N, tn), _round_up(K, tk)

        # Keep both v7x TensorCores busy when M collapses to a single tile.
        if (Mp // tm) == 1 and (Np // tn) == 1 and tn > 128:
            tn = _round_up(max(128, tn // 2), 128)
            Np = _round_up(N, tn)

        grid = (Mp // tm, Np // tn, Kp // tk)

        x_p = x_c if (Mp == M and Kp == K) else jnp.pad(
            x_c, ((0, Mp - M), (0, Kp - K)))
        w_p = w_kn if (Kp == K and Np == N) else jnp.pad(
            w_kn, ((0, Kp - K), (0, Np - N)))

        # Real streamed traffic: x is read grid_N times, W is read grid_M times.
        cost = pl.CostEstimate(
            flops=2 * Mp * Np * Kp,
            transcendentals=0,
            bytes_accessed=(Mp * Kp * in_bytes) * grid[1]
                           + (Kp * Np * in_bytes) * grid[0]
                           + Mp * Np * out_bytes,
        )

        if out_dtype == jnp.float32:
            kernel = _ffn_stream_kernel_f32
            scratch = []  # accumulate directly into the K-resident output block
        else:
            kernel = _ffn_stream_kernel_acc
            scratch = [pltpu.VMEM((tm, tn), jnp.float32)]

        out_p = pl.pallas_call(
            kernel,
            out_shape=jax.ShapeDtypeStruct((Mp, Np), out_dtype),
            grid_spec=pltpu.PrefetchScalarGridSpec(
                num_scalar_prefetch=0,
                grid=grid,
                in_specs=[
                    pl.BlockSpec((tm, tk), lambda i, j, k: (i, k)),
                    pl.BlockSpec((tk, tn), lambda i, j, k: (k, j)),
                ],
                out_specs=pl.BlockSpec((tm, tn), lambda i, j, k: (i, j)),
                scratch_shapes=scratch,
            ),
            compiler_params=pltpu.CompilerParams(
                dimension_semantics=("parallel", "parallel", "arbitrary"),
                vmem_limit_bytes=vmem_limit,
            ),
            cost_estimate=cost,
        )(x_p, w_p)

    out = out_p[:M, :N] if (Mp != M or Np != N) else out_p
    if bias is not None:
        out = out + bias.astype(out_dtype)
    return out.reshape(orig_shape[:-1] + (N,))


def feed_forward_network(x, weight, bias=None, *, mxu_dtype=jnp.bfloat16, **kw):
    """Functional wrapper: x (..., K), torch-layout weight (N, K) -> (..., N).

    For repeated calls, use prepare_ffn_weight()/FeedForwardNetwork so the
    weight transpose+cast happens once, not per call.
    """
    return ffn_forward(x, prepare_ffn_weight(weight, mxu_dtype), bias, **kw)


# ---------------------------------------------------------------------------
# Parameter init (matches torch defaults used by the module)
# ---------------------------------------------------------------------------

def xavier_uniform(key, out_features, in_features, dtype=jnp.float32):
    # torch.nn.init.xavier_uniform_ (gain=1): bound = sqrt(6 / (fan_in + fan_out))
    bound = math.sqrt(6.0 / (in_features + out_features))
    return jax.random.uniform(key, (out_features, in_features), dtype=dtype,
                              minval=-bound, maxval=bound)


def kaiming_uniform(key, out_features, in_features, dtype=jnp.float32):
    # torch.nn.init.kaiming_uniform_(nonlinearity='relu'): bound = sqrt(6 / fan_in)
    bound = math.sqrt(6.0 / in_features)
    return jax.random.uniform(key, (out_features, in_features), dtype=dtype,
                              minval=-bound, maxval=bound)


class FeedForwardNetwork:
    """JAX/Pallas port of the PyTorch FeedForwardNetwork module."""

    def __init__(self, input_size, output_size, init_method="xavier_uniform",
                 bias=False, *, key=None, mxu_dtype=jnp.bfloat16,
                 param_dtype=jnp.float32):
        key = jax.random.PRNGKey(0) if key is None else key
        if init_method == "xavier_uniform":
            self.weight = xavier_uniform(key, output_size, input_size, param_dtype)
        elif init_method == "kaiming_uniform":
            self.weight = kaiming_uniform(key, output_size, input_size, param_dtype)
        else:
            raise ValueError("Unsupported initialization method")
        self.bias = jnp.zeros((output_size,), param_dtype) if bias else None
        # One-time weight prep (transpose + MXU-dtype cast), reused every call.
        self.w_prepared = prepare_ffn_weight(self.weight, mxu_dtype)

    def __call__(self, x, **kw):
        return ffn_forward(x, self.w_prepared, self.bias, **kw)


# ---------------------------------------------------------------------------
# Demo / self-test
# ---------------------------------------------------------------------------

if __name__ == "__main__":
    input_size = 32
    output_size = 64
    batch = 8

    key = jax.random.PRNGKey(0)
    kx, kw = jax.random.split(key)

    x = jax.random.normal(kx, (batch, input_size), dtype=jnp.float32)

    ffn = FeedForwardNetwork(input_size, output_size,
                             init_method="xavier_uniform", bias=False, key=kw)

    # Default path (weight-resident fast path at these small shapes).
    out = jax.block_until_ready(ffn(x))
    assert out.shape == (batch, output_size)
    assert out.dtype == jnp.float32

    # Reference 1: same bf16-operand / f32-accumulate math -> tight tolerance.
    ref_bf16 = jnp.dot(
        x.astype(jnp.bfloat16),
        ffn.weight.T.astype(jnp.bfloat16),
        preferred_element_type=jnp.float32,
    )
    assert jnp.allclose(out, ref_bf16, atol=1e-3, rtol=1e-3)

    # Reference 2: full f32 linear (torch semantics) -> looser tolerance for the
    # bf16 operand cast.
    ref_f32 = x @ ffn.weight.T
    assert jnp.allclose(out, ref_f32, atol=5e-2, rtol=5e-2)

    # Also exercise the streaming (M/N/K-tiled, scratch-free f32 accumulation)
    # path by forcing it at the same small shapes.
    out_stream = jax.block_until_ready(
        ffn_forward(x, ffn.w_prepared, weight_resident=False))
    assert out_stream.shape == (batch, output_size)
    assert jnp.allclose(out_stream, ref_bf16, atol=1e-3, rtol=1e-3)

    print("KERNEL_OK")
</pallas_src>

<mosaic_0001>
module attributes {stable_mosaic.version = 11 : i64} {
  func.func @_ffn_resident_kernel(%arg0: i32, %arg1: memref<8x128xbf16, #tpu.memory_space<vmem>>, %arg2: memref<128x128xbf16, #tpu.memory_space<vmem>>, %arg3: memref<8x128xf32, #tpu.memory_space<vmem>>) attributes {dimension_semantics = [#tpu.dimension_semantics<parallel>], iteration_bounds = array<i64: 1>, scalar_prefetch = 0 : i64, scratch_operands = 0 : i64, tpu.core_type = #tpu.core_type<tc>, window_params = [{transform_indices = @transform_0, window_bounds = array<i64: 8, 128>}, {pipeline_mode = #tpu.pipeline_mode<synchronous>, transform_indices = @transform_1, window_bounds = array<i64: 128, 128>}, {transform_indices = @transform_2, window_bounds = array<i64: 8, 128>}]} {
    %c0 = arith.constant 0 : index
    %c0_0 = arith.constant 0 : index
    %0 = vector.load %arg1[%c0, %c0_0] : memref<8x128xbf16, #tpu.memory_space<vmem>>, vector<8x128xbf16>
    %c0_1 = arith.constant 0 : index
    %c0_2 = arith.constant 0 : index
    %1 = vector.load %arg2[%c0_1, %c0_2] : memref<128x128xbf16, #tpu.memory_space<vmem>>, vector<128x128xbf16>
    %cst = arith.constant dense<0.000000e+00> : vector<8x128xf32>
    %2 = tpu.matmul %0, %1, %cst {dimension_numbers = #tpu.dot_dimension_numbers<[1], [0], [0], [1], [0, 0, 1, 1], [], []>} : vector<8x128xbf16>, vector<128x128xbf16>, vector<8x128xf32> -> vector<8x128xf32>
    %c0_3 = arith.constant 0 : index
    %c0_4 = arith.constant 0 : index
    %3 = vector.load %arg3[%c0_3, %c0_4] : memref<8x128xf32, #tpu.memory_space<vmem>>, vector<8x128xf32>
    tpu.vector_store %arg3[%c0_3, %c0_4], %2 {strides = array<i32>} : memref<8x128xf32, #tpu.memory_space<vmem>>, vector<8x128xf32>,
    return
  }
  func.func @transform_0(%arg0: i32) -> (i32, i32) {
    %c0_i32 = arith.constant 0 : i32
    %c0_i32_0 = arith.constant 0 : i32
    return %arg0, %c0_i32 : i32, i32
  }
  func.func @transform_1(%arg0: i32) -> (i32, i32) {
    %c0_i32 = arith.constant 0 : i32
    %c0_i32_0 = arith.constant 0 : i32
    %c0_i32_1 = arith.constant 0 : i32
    return %c0_i32, %c0_i32_0 : i32, i32
  }
  func.func @transform_2(%arg0: i32) -> (i32, i32) {
    %c0_i32 = arith.constant 0 : i32
    %c0_i32_0 = arith.constant 0 : i32
    return %arg0, %c0_i32 : i32, i32
  }
}

</mosaic_0001>

<llo_original>
// kernel: tpu_custom_call.1
$region0: #{tpu_custom_call.1}
  #allocation0 [shape = 'u32[]', space=smem, size = 0x4, offset = 0x4, fixed_abs, tag = 'smem constant byte address 0x4 - core index']
  #allocation1 [shape = 'u32[144,128]{1,0:T(1,128)}', space=vmem, size = 0x12000, scoped, tag = 'internal scratch']
  %s0 = inlined_call_operand.hbm [shape: bf16[8,128], index: 0, kind: input, shape index: {}]
  %s1 = inlined_call_operand.hbm [shape: bf16[128,128], index: 1, kind: input, shape index: {}]
  %s2 = inlined_call_operand.hbm [shape: f32[8,128], index: 2, kind: output, shape index: {}]
  %s3 = sld [smem:[#allocation0]]
  $region26: #{tpu_custom_call.1} parent=0
    _
  %s5 = ssub.s32 1, %s3
  %s6 = scalar_select 0, %s5, %s3
  $region1: #{tpu_custom_call.1} parent=0
    #allocation2 [shape = 'u8[2048]{0}', space=vmem, size = 0x800, scoped, tag = 'input window, operand 0, single buffered']
    #allocation3 [shape = 's32[1]{0}', space=sflag, size = 0x4, scoped, tag = 'scoped memory for tpu_custom_call.1']
    #allocation4 [shape = 's32[1]{0}', space=sflag, size = 0x4, scoped, tag = 'scoped memory for tpu_custom_call.1']
    #allocation5 [shape = 'u8[32768]{0}', space=vmem, size = 0x8000, scoped, tag = 'input window, operand 1, single buffered']
    #allocation6 [shape = 's32[1]{0}', space=sflag, size = 0x4, scoped, tag = 'scoped memory for tpu_custom_call.1']
    #allocation7 [shape = 'u8[4096]{0}', space=vmem, size = 0x1000, scoped, tag = 'output window, operand 0, single buffered']
    %7 = vsyncpa [#allocation3], 0
    %8 = vsyncpa [#allocation6], 0
    %9 = vsyncpa [#allocation4], 0
    // Predicated region
    $region2: #{tpu_custom_call.1} parent=1 // pred_check
      _
    $region3: #{tpu_custom_call.1} parent=1 // pred_check_branch
      %11 = sbr.rel (0) target = $region5
    $region4: #{tpu_custom_call.1} parent=1 // pred_region
      %s13 = ssub.s32 64, 64
      %14 = vsyncadd [#allocation3], %s13
      %s16 = sshll.u32 [#allocation2], 4
      %s17 = int_to_ptr.vmem [resolvable:$true] %s16
      %19 = dma.hbm_to_vmem [thread:$0]  %s0, 64, %s17, [#allocation3]
    $region5: #{tpu_custom_call.1} parent=1 // pred_fallthru
      _
    // Predicated region
    $region6: #{tpu_custom_call.1} parent=1 // pred_check
      _
    $region7: #{tpu_custom_call.1} parent=1 // pred_check_branch
      %21 = sbr.rel (0) target = $region9
    $region8: #{tpu_custom_call.1} parent=1 // pred_region
      %s23 = ssub.s32 1024, 1024
      %24 = vsyncadd [#allocation6], %s23
      %s25 = sshll.u32 [#allocation5], 4
      %s26 = int_to_ptr.vmem [resolvable:$true] %s25
      %31 = dma.hbm_to_vmem [thread:$0]  %s1, 1024, %s26, [#allocation6], 64, 64, 4
    $region9: #{tpu_custom_call.1} parent=1 // pred_fallthru
      _
    // Predicated region
    $region10: #{tpu_custom_call.1} parent=1 // pred_check
      _
    $region11: #{tpu_custom_call.1} parent=1 // pred_check_branch
      %33 = sbr.rel (0) target = $region13
    $region12: #{tpu_custom_call.1} parent=1 // pred_region
      %34 = dma.done [#allocation3], 64
    $region13: #{tpu_custom_call.1} parent=1 // pred_fallthru
      _
    // Predicated region
    $region14: #{tpu_custom_call.1} parent=1 // pred_check
      _
    $region15: #{tpu_custom_call.1} parent=1 // pred_check_branch
      %36 = sbr.rel (0) target = $region17
    $region16: #{tpu_custom_call.1} parent=1 // pred_region
      %37 = dma.done [#allocation6], 1024
    $region17: #{tpu_custom_call.1} parent=1 // pred_fallthru
      _
    %v39 = vld [vmem:[#allocation2] sm:$0xf]
    %v40 = vld [vmem:[#allocation5] sm:$0xf]
    %v41 = vld [vmem:[#allocation5 + $0x4] sm:$0xf]
    %v42 = vld [vmem:[#allocation5 + $0x8] sm:$0xf]
    %v43 = vld [vmem:[#allocation5 + $0xc] sm:$0xf]
    %v44 = vld [vmem:[#allocation5 + $0x10] sm:$0xf]
    %v45 = vld [vmem:[#allocation5 + $0x14] sm:$0xf]
    %v46 = vld [vmem:[#allocation5 + $0x18] sm:$0xf]
    %v47 = vld [vmem:[#allocation5 + $0x1c] sm:$0xf]
    %v48 = vld [vmem:[#allocation5 + $0x20] sm:$0xf]
    %v49 = vld [vmem:[#allocation5 + $0x24] sm:$0xf]
    %v50 = vld [vmem:[#allocation5 + $0x28] sm:$0xf]
    %v51 = vld [vmem:[#allocation5 + $0x2c] sm:$0xf]
    %v52 = vld [vmem:[#allocation5 + $0x30] sm:$0xf]
    %v53 = vld [vmem:[#allocation5 + $0x34] sm:$0xf]
    %v54 = vld [vmem:[#allocation5 + $0x38] sm:$0xf]
    %v55 = vld [vmem:[#allocation5 + $0x3c] sm:$0xf]
    %v72 = vunpack.c.l.b16 %v40
    %v73 = vunpack.c.l.b16 %v41
    %v74 = vunpack.c.l.b16 %v42
    %v75 = vunpack.c.l.b16 %v43
    %v76 = vunpack.c.l.b16 %v44
    %v77 = vunpack.c.l.b16 %v45
    %v78 = vunpack.c.l.b16 %v46
    %v79 = vunpack.c.l.b16 %v47
    %v80 = vunpack.c.l.b16 %v48
    %v81 = vunpack.c.l.b16 %v49
    %v82 = vunpack.c.l.b16 %v50
    %v83 = vunpack.c.l.b16 %v51
    %v84 = vunpack.c.l.b16 %v52
    %v85 = vunpack.c.l.b16 %v53
    %v86 = vunpack.c.l.b16 %v54
    %v87 = vunpack.c.l.b16 %v55
    %v88 = vpack.c.b16 %v73, %v72
    %v89 = vpack.c.b16 %v75, %v74
    %v90 = vpack.c.b16 %v77, %v76
    %v91 = vpack.c.b16 %v79, %v78
    %v92 = vpack.c.b16 %v81, %v80
    %v93 = vpack.c.b16 %v83, %v82
    %v94 = vpack.c.b16 %v85, %v84
    %v95 = vpack.c.b16 %v87, %v86
    %104 = vmatprep.subr.bf16.mxu0 0
    %105 = vmatpush1.bf16.msra.mxu0 %v95
    %106 = vmatprep.subr.bf16.mxu0 0
    %107 = vmatpush1.bf16.msra.mxu0 %v94
    %108 = vmatprep.subr.bf16.mxu0 0
    %109 = vmatpush1.bf16.msra.mxu0 %v93
    %110 = vmatprep.subr.bf16.mxu0 0
    %111 = vmatpush1.bf16.msra.mxu0 %v92
    %112 = vmatprep.subr.bf16.mxu0 0
    %113 = vmatpush1.bf16.msra.mxu0 %v91
    %114 = vmatprep.subr.bf16.mxu0 0
    %115 = vmatpush1.bf16.msra.mxu0 %v90
    %116 = vmatprep.subr.bf16.mxu0 0
    %117 = vmatpush1.bf16.msra.mxu0 %v89
    %118 = vmatprep.subr.bf16.mxu0 0
    %119 = vmatpush1.bf16.msra.mxu0 %v88
    %120 = vmatprep.subr.bf16.mxu0 0
    %121 = vmatpush2.bf16.msra.mxu0 0
    %122 = vmatprep.subr.bf16.mxu0 0
    %123 = vmatpush2.bf16.msra.mxu0 0
    %124 = vmatprep.subr.bf16.mxu0 0
    %125 = vmatpush2.bf16.msra.mxu0 0
    %126 = vmatprep.subr.bf16.mxu0 0
    %127 = vmatpush2.bf16.msra.mxu0 0
    %128 = vmatprep.subr.bf16.mxu0 0
    %129 = vmatpush2.bf16.msra.mxu0 0
    %130 = vmatprep.subr.bf16.mxu0 0
    %131 = vmatpush2.bf16.msra.mxu0 0
    %132 = vmatprep.subr.bf16.mxu0 0
    %133 = vmatpush2.bf16.msra.mxu0 0
    %134 = vmatprep.subr.bf16.mxu0 0
    %135 = vmatpush2.bf16.msra.mxu0 0
    %136 = vmatprep.mubr.bf16.mxu0 0
    %137 = vmatmul.mubr.bf16.gmra.mxu0 %v39
    %v138 = vpop.f32.mrf.mxu0
    %v139 = vadd.f32 0.0, %v138
    %v140 = vpop.f32.mrf.mxu0
    %v141 = vpop.f32.mrf.mxu0
    %v142 = vpop.f32.mrf.mxu0
    %143 = vdwg.mxu0
    %144 = vst [vmem:[#allocation7] sm:$0xff] %v139
    // Predicated region
    $region18: #{tpu_custom_call.1} parent=1 // pred_check
      _
    $region19: #{tpu_custom_call.1} parent=1 // pred_check_branch
      %146 = sbr.rel (0) target = $region21
    $region20: #{tpu_custom_call.1} parent=1 // pred_region
      %s148 = ssub.s32 128, 128
      %149 = vsyncadd [#allocation4], %s148
      %s151 = sshll.u32 [#allocation7], 4
      %s152 = int_to_ptr.vmem [resolvable:$true] %s151
      %154 = dma.vmem_to_hbm [thread:$0]  %s152, 128, %s2, [#allocation4]
    $region21: #{tpu_custom_call.1} parent=1 // pred_fallthru
      _
    // Predicated region
    $region22: #{tpu_custom_call.1} parent=1 // pred_check
      _
    $region23: #{tpu_custom_call.1} parent=1 // pred_check_branch
      %156 = sbr.rel (0) target = $region25
    $region24: #{tpu_custom_call.1} parent=1 // pred_region
      %157 = dma.done [#allocation4], 128
    $region25: #{tpu_custom_call.1} parent=1 // pred_fallthru
      _
    %158 = vsyncpa [#allocation3], 1
    %159 = vsyncpa [#allocation6], 1
    %160 = vsyncpa [#allocation4], 1

</llo_original>
